<compile_context>
chip_gen: v7x
topology: tpu7x:2x2x1
jax: 0.10.0
libtpu: 0.0.40
codegen_flags: <defaults>
</compile_context>

<pallas_src>
import functools

import jax
import jax.numpy as jnp
from jax import lax
from jax.experimental import pallas as pl
from jax.experimental.pallas import tpu as pltpu

LANE = 128
SUBLANE = 8
ACC_ROWS = 32                 # 4 independent (8,128) accumulation chains
MAX_TILE_ROWS = 8192          # 8192 * 128 * 4 B = 4 MiB per input block
VMEM_LIMIT_BYTES = 40 << 20   # 2 inputs x 2 buffers x 4 MiB = 16 MiB + headroom


def _round_up(x, m):
    return ((x + m - 1) // m) * m


def _cdiv(a, b):
    return -(-a // b)


def _tensorcore_count():
    """Best-effort TensorCores-per-chip (2 on v7x, 1 on v5e/v6e)."""
    try:
        info = pltpu.get_tpu_info()
        for name in ("num_cores", "num_tensorcores", "tensorcores_per_chip",
                     "core_count", "cores_per_chip"):
            v = getattr(info, name, None)
            if v:
                return max(1, int(v))
    except Exception:
        pass
    try:
        d = jax.devices()[0]
        for name in ("num_cores", "core_count"):
            v = getattr(d, name, None)
            if v:
                return max(1, int(v))
    except Exception:
        pass
    return 1


def _l1_partial_kernel(a_ref, b_ref, o_ref, acc_ref, *, tile_rows, rows_valid,
                       blocks_per_split):
    c = pl.program_id(0)   # split index ("parallel"; shards across TCs on v7x)
    i = pl.program_id(1)   # row-block index within split (reduction axis)

    @pl.when(i == 0)
    def _():
        acc_ref[...] = jnp.zeros_like(acc_ref)

    # Logical (un-clamped) row offset of this block.  Used only to decide the
    # tail path and, in the tail path, to mask rows past the valid range.
    # NOTE: int32 row indices -> valid for < 2**31 rows (~2.7e11 elements).
    row_start = (c * blocks_per_split + i) * tile_rows
    groups = tile_rows // ACC_ROWS

    def _accumulate(d):
        # (tile_rows,128) -> (groups, ACC_ROWS, 128): ACC_ROWS % 8 == 0 keeps
        # the reshape a free, (8,128)-tile-aligned layout change.  ACC_ROWS/8
        # independent add chains into the persistent accumulator give the VPU
        # ILP instead of one long dependent chain.
        acc_ref[...] += d.reshape(groups, ACC_ROWS, LANE).sum(axis=0)

    # Fast path: block fully inside the valid rows -> no iota/compare/select.
    @pl.when(row_start + tile_rows <= rows_valid)
    def _():
        a = a_ref[...].astype(jnp.float32)
        b = b_ref[...].astype(jnp.float32)
        _accumulate(jnp.abs(a - b))

    # Tail path: last (or clamped-overhang) block of a split.  Mask rows past
    # rows_valid so unspecified out-of-bounds block contents contribute zero.
    @pl.when(row_start + tile_rows > rows_valid)
    def _():
        a = a_ref[...].astype(jnp.float32)
        b = b_ref[...].astype(jnp.float32)
        row_ids = row_start + lax.broadcasted_iota(jnp.int32, (tile_rows, LANE), 0)
        _accumulate(jnp.where(row_ids < rows_valid, jnp.abs(a - b), 0.0))

    # Single lane-dense write of this split's partial sums at the end.
    @pl.when(i == pl.num_programs(1) - 1)
    def _():
        o_ref[...] = acc_ref[...]


@jax.jit
def l1_loss_pallas(image_fused, GT):
    assert image_fused.shape == GT.shape, "L1Loss requires matching shapes"
    n_elem = image_fused.size
    if n_elem == 0:
        return jnp.float32(0.0)

    a = image_fused.reshape(-1)
    b = GT.reshape(-1)

    # Lane-aligned prefix goes through the kernel; the <=127-element remainder
    # (rare; only when numel % 128 != 0) is summed directly in JAX, avoiding a
    # full-array jnp.pad pass over both inputs.
    rows = n_elem // LANE
    rem = n_elem - rows * LANE

    tail_sum = jnp.float32(0.0)
    if rem:
        ta = lax.slice(a, (rows * LANE,), (n_elem,)).astype(jnp.float32)
        tb = lax.slice(b, (rows * LANE,), (n_elem,)).astype(jnp.float32)
        tail_sum = jnp.sum(jnp.abs(ta - tb))

    if rows == 0:
        return (tail_sum / jnp.float32(n_elem)).astype(jnp.float32)

    if rem:
        # TODO(synk): a manual-DMA (pl.ANY) path could read the prefix in place
        # and avoid this prefix copy in the misaligned case.
        a_main = lax.slice(a, (0,), (rows * LANE,))
        b_main = lax.slice(b, (0,), (rows * LANE,))
    else:
        a_main, b_main = a, b

    a2 = a_main.reshape(rows, LANE)
    b2 = b_main.reshape(rows, LANE)

    # Big, ACC_ROWS-aligned row tiles (never bigger than needed).
    tile_rows = min(MAX_TILE_ROWS, _round_up(rows, ACC_ROWS))
    total_blocks = _cdiv(rows, tile_rows)

    # TensorCore-count-aware split: 1 on single-TC chips (no wasted clamped
    # block re-read), up to num-TCs on multi-TC chips (v7x).
    nsplit = max(1, min(_tensorcore_count(), total_blocks))
    blocks_per_split = _cdiv(total_blocks, nsplit)

    def in_map(c, i):
        # Clamp so overhanging grid steps re-read a valid block; the kernel
        # masks their contribution to zero based on the un-clamped index.
        blk = jnp.minimum(c * blocks_per_split + i, total_blocks - 1)
        return (blk, 0)

    kernel = functools.partial(
        _l1_partial_kernel,
        tile_rows=tile_rows,
        rows_valid=rows,
        blocks_per_split=blocks_per_split,
    )

    itemsize = jnp.dtype(image_fused.dtype).itemsize
    cost = pl.CostEstimate(
        flops=3 * rows * LANE,
        bytes_accessed=2 * rows * LANE * itemsize,
        transcendentals=0,
    )

    partials = pl.pallas_call(
        kernel,
        out_shape=jax.ShapeDtypeStruct((nsplit * ACC_ROWS, LANE), jnp.float32),
        grid_spec=pltpu.PrefetchScalarGridSpec(
            num_scalar_prefetch=0,
            grid=(nsplit, blocks_per_split),
            in_specs=[
                pl.BlockSpec((tile_rows, LANE), in_map),
                pl.BlockSpec((tile_rows, LANE), in_map),
            ],
            out_specs=pl.BlockSpec((ACC_ROWS, LANE), lambda c, i: (c, 0)),
            scratch_shapes=[pltpu.VMEM((ACC_ROWS, LANE), jnp.float32)],
        ),
        compiler_params=pltpu.CompilerParams(
            dimension_semantics=("parallel", "arbitrary"),
            vmem_limit_bytes=VMEM_LIMIT_BYTES,
        ),
        cost_estimate=cost,
    )(a2, b2)

    total = jnp.sum(partials, dtype=jnp.float32) + tail_sum
    # Mean over the ORIGINAL element count (torch.nn.L1Loss semantics).
    return (total / jnp.float32(n_elem)).astype(jnp.float32)


if __name__ == "__main__":
    key = jax.random.PRNGKey(0)
    k1, k2 = jax.random.split(key)
    # Shapes consistent with a fused image / ground-truth pair (NCHW).
    image_fused = jax.random.normal(k1, (2, 4, 16, 16), dtype=jnp.float32)
    GT = jax.random.normal(k2, (2, 4, 16, 16), dtype=jnp.float32)

    loss = l1_loss_pallas(image_fused, GT)
    jax.block_until_ready(loss)

    # Reference check in plain JAX (same semantics as torch.nn.L1Loss()).
    ref = jnp.mean(jnp.abs(image_fused - GT))
    assert jnp.allclose(loss, ref, rtol=1e-5, atol=1e-6), (loss, ref)

    print("KERNEL_OK")
</pallas_src>

<mosaic_0001>
module attributes {stable_mosaic.version = 11 : i64} {
  func.func @_l1_partial_kernel(%arg0: i32, %arg1: i32, %arg2: memref<32x128xf32, #tpu.memory_space<vmem>>, %arg3: memref<32x128xf32, #tpu.memory_space<vmem>>, %arg4: memref<32x128xf32, #tpu.memory_space<vmem>>, %arg5: memref<32x128xf32, #tpu.memory_space<vmem>>) attributes {dimension_semantics = [#tpu.dimension_semantics<parallel>, #tpu.dimension_semantics<arbitrary>], iteration_bounds = array<i64: 1, 1>, scalar_prefetch = 0 : i64, scratch_operands = 1 : i64, tpu.core_type = #tpu.core_type<tc>, window_params = [{transform_indices = @transform_0, window_bounds = array<i64: 32, 128>}, {transform_indices = @transform_1, window_bounds = array<i64: 32, 128>}, {transform_indices = @transform_2, window_bounds = array<i64: 32, 128>}]} {
    %c0_i32 = arith.constant 0 : i32
    %0 = arith.cmpi eq, %arg1, %c0_i32 : i32
    %1 = arith.extui %0 : i1 to i32
    %c0_i32_0 = arith.constant 0 : i32
    %2 = arith.cmpi ne, %1, %c0_i32_0 : i32
    scf.if %2 {
      %cst = arith.constant 0.000000e+00 : f32
      %17 = vector.broadcast %cst : f32 to vector<32x128xf32>
      %c0 = arith.constant 0 : index
      %c0_8 = arith.constant 0 : index
      %18 = vector.load %arg5[%c0, %c0_8] : memref<32x128xf32, #tpu.memory_space<vmem>>, vector<32x128xf32>
      tpu.vector_store %arg5[%c0, %c0_8], %17 {strides = array<i32>} : memref<32x128xf32, #tpu.memory_space<vmem>>, vector<32x128xf32>,
    } else {
    }
    %c1_i32 = arith.constant 1 : i32
    %3 = arith.muli %arg0, %c1_i32 : i32
    %4 = arith.addi %3, %arg1 : i32
    %c32_i32 = arith.constant 32 : i32
    %5 = arith.muli %4, %c32_i32 : i32
    %c32_i32_1 = arith.constant 32 : i32
    %6 = arith.addi %5, %c32_i32_1 : i32
    %c16_i32 = arith.constant 16 : i32
    %7 = arith.cmpi sle, %6, %c16_i32 : i32
    %8 = arith.extui %7 : i1 to i32
    %c0_i32_2 = arith.constant 0 : i32
    %9 = arith.cmpi ne, %8, %c0_i32_2 : i32
    scf.if %9 {
      %c0 = arith.constant 0 : index
      %c0_8 = arith.constant 0 : index
      %17 = vector.load %arg2[%c0, %c0_8] : memref<32x128xf32, #tpu.memory_space<vmem>>, vector<32x128xf32>
      %c0_9 = arith.constant 0 : index
      %c0_10 = arith.constant 0 : index
      %18 = vector.load %arg3[%c0_9, %c0_10] : memref<32x128xf32, #tpu.memory_space<vmem>>, vector<32x128xf32>
      %19 = arith.subf %17, %18 : vector<32x128xf32>
      %20 = math.absf %19 : vector<32x128xf32>
      %c0_11 = arith.constant 0 : index
      %c0_12 = arith.constant 0 : index
      %21 = vector.load %arg5[%c0_11, %c0_12] : memref<32x128xf32, #tpu.memory_space<vmem>>, vector<32x128xf32>
      %22 = vector.shape_cast %20 : vector<32x128xf32> to vector<1x32x128xf32>
      %cst = arith.constant dense<0.000000e+00> : vector<32x128xf32>
      %23 = vector.multi_reduction <add>, %22, %cst [0] : vector<1x32x128xf32> to vector<32x128xf32>
      %24 = arith.addf %21, %23 : vector<32x128xf32>
      %c0_13 = arith.constant 0 : index
      %c0_14 = arith.constant 0 : index
      %25 = vector.load %arg5[%c0_13, %c0_14] : memref<32x128xf32, #tpu.memory_space<vmem>>, vector<32x128xf32>
      tpu.vector_store %arg5[%c0_13, %c0_14], %24 {strides = array<i32>} : memref<32x128xf32, #tpu.memory_space<vmem>>, vector<32x128xf32>,
    } else {
    }
    %c32_i32_3 = arith.constant 32 : i32
    %10 = arith.addi %5, %c32_i32_3 : i32
    %c16_i32_4 = arith.constant 16 : i32
    %11 = arith.cmpi sgt, %10, %c16_i32_4 : i32
    %12 = arith.extui %11 : i1 to i32
    %c0_i32_5 = arith.constant 0 : i32
    %13 = arith.cmpi ne, %12, %c0_i32_5 : i32
    scf.if %13 {
      %c0 = arith.constant 0 : index
      %c0_8 = arith.constant 0 : index
      %17 = vector.load %arg2[%c0, %c0_8] : memref<32x128xf32, #tpu.memory_space<vmem>>, vector<32x128xf32>
      %c0_9 = arith.constant 0 : index
      %c0_10 = arith.constant 0 : index
      %18 = vector.load %arg3[%c0_9, %c0_10] : memref<32x128xf32, #tpu.memory_space<vmem>>, vector<32x128xf32>
      %19 = tpu.iota {dimensions = array<i32: 0>} : vector<32x128xi32>
      %20 = vector.broadcast %5 : i32 to vector<32x128xi32>
      %21 = arith.addi %20, %19 : vector<32x128xi32>
      %c16_i32_11 = arith.constant 16 : i32
      %22 = vector.broadcast %c16_i32_11 : i32 to vector<32x128xi32>
      %23 = arith.cmpi slt, %21, %22 : vector<32x128xi32>
      %24 = arith.subf %17, %18 : vector<32x128xf32>
      %25 = math.absf %24 : vector<32x128xf32>
      %cst = arith.constant 0.000000e+00 : f32
      %26 = vector.broadcast %cst : f32 to vector<32x128xf32>
      %27 = arith.select %23, %25, %26 : vector<32x128xi1>, vector<32x128xf32>
      %c0_12 = arith.constant 0 : index
      %c0_13 = arith.constant 0 : index
      %28 = vector.load %arg5[%c0_12, %c0_13] : memref<32x128xf32, #tpu.memory_space<vmem>>, vector<32x128xf32>
      %29 = vector.shape_cast %27 : vector<32x128xf32> to vector<1x32x128xf32>
      %cst_14 = arith.constant dense<0.000000e+00> : vector<32x128xf32>
      %30 = vector.multi_reduction <add>, %29, %cst_14 [0] : vector<1x32x128xf32> to vector<32x128xf32>
      %31 = arith.addf %28, %30 : vector<32x128xf32>
      %c0_15 = arith.constant 0 : index
      %c0_16 = arith.constant 0 : index
      %32 = vector.load %arg5[%c0_15, %c0_16] : memref<32x128xf32, #tpu.memory_space<vmem>>, vector<32x128xf32>
      tpu.vector_store %arg5[%c0_15, %c0_16], %31 {strides = array<i32>} : memref<32x128xf32, #tpu.memory_space<vmem>>, vector<32x128xf32>,
    } else {
    }
    %c0_i32_6 = arith.constant 0 : i32
    %14 = arith.cmpi eq, %arg1, %c0_i32_6 : i32
    %15 = arith.extui %14 : i1 to i32
    %c0_i32_7 = arith.constant 0 : i32
    %16 = arith.cmpi ne, %15, %c0_i32_7 : i32
    scf.if %16 {
      %c0 = arith.constant 0 : index
      %c0_8 = arith.constant 0 : index
      %17 = vector.load %arg5[%c0, %c0_8] : memref<32x128xf32, #tpu.memory_space<vmem>>, vector<32x128xf32>
      %c0_9 = arith.constant 0 : index
      %c0_10 = arith.constant 0 : index
      %18 = vector.load %arg4[%c0_9, %c0_10] : memref<32x128xf32, #tpu.memory_space<vmem>>, vector<32x128xf32>
      tpu.vector_store %arg4[%c0_9, %c0_10], %17 {strides = array<i32>} : memref<32x128xf32, #tpu.memory_space<vmem>>, vector<32x128xf32>,
    } else {
    }
    return
  }
  func.func @transform_0(%arg0: i32, %arg1: i32) -> (i32, i32) {
    %c1_i32 = arith.constant 1 : i32
    %0 = arith.muli %arg0, %c1_i32 : i32
    %1 = arith.addi %0, %arg1 : i32
    %c0_i32 = arith.constant 0 : i32
    %2 = arith.minsi %1, %c0_i32 : i32
    %c0_i32_0 = arith.constant 0 : i32
    %c0_i32_1 = arith.constant 0 : i32
    return %2, %c0_i32_0 : i32, i32
  }
  func.func @transform_1(%arg0: i32, %arg1: i32) -> (i32, i32) {
    %c1_i32 = arith.constant 1 : i32
    %0 = arith.muli %arg0, %c1_i32 : i32
    %1 = arith.addi %0, %arg1 : i32
    %c0_i32 = arith.constant 0 : i32
    %2 = arith.minsi %1, %c0_i32 : i32
    %c0_i32_0 = arith.constant 0 : i32
    %c0_i32_1 = arith.constant 0 : i32
    return %2, %c0_i32_0 : i32, i32
  }
  func.func @transform_2(%arg0: i32, %arg1: i32) -> (i32, i32) {
    %c0_i32 = arith.constant 0 : i32
    %c0_i32_0 = arith.constant 0 : i32
    return %arg0, %c0_i32 : i32, i32
  }
}

</mosaic_0001>

<llo_original>
// kernel: l1_loss_pallas.1
$region0: #{l1_loss_pallas.1}
  #allocation0 [shape = 'u32[]', space=smem, size = 0x4, offset = 0x4, fixed_abs, tag = 'smem constant byte address 0x4 - core index']
  #allocation1 [shape = 'u32[144,128]{1,0:T(1,128)}', space=vmem, size = 0x12000, scoped, tag = 'internal scratch']
  #allocation2 [shape = 'f32[32,128]{1,0:T(8,128)}', space=vmem, size = 0x4000, scoped, tag = 'scratch operand']
  %s0 = inlined_call_operand.vmem [shape: f32[16,128], index: 0, kind: input, shape index: {}]
  %s1 = inlined_call_operand.vmem [shape: f32[16,128], index: 1, kind: input, shape index: {}]
  %s2 = inlined_call_operand.vmem [shape: f32[32,128], index: 2, kind: output, shape index: {}]
  %s3 = sld [smem:[#allocation0]]
  $region34: #{l1_loss_pallas.1} parent=0
    _
  %s5 = ssub.s32 1, %s3
  %s6 = scalar_select 0, %s5, %s3
  // Predicated region
  $region2: #{l1_loss_pallas.1} parent=0 // pred_check
    _
  $region3: #{l1_loss_pallas.1} parent=0 // pred_check_branch
    %8 = sbr.rel (0) target = $region5
  $region4: #{l1_loss_pallas.1} parent=0 // pred_region
    %s9 = sadd.s32 0, 0
    %p10 = scmp.lt.s32.totalorder %s9, 0
    %s11 = scalar_select %p10, %s9, 0
    %s12 = smul.u32 4, %s11
    %s13 = ssub.s32 2, %s12
    %s14 = smul.u32 128, %s13
    %p15 = scmp.lt.s32.totalorder %s12, 1
    %s16 = scalar_select %p15, %s12, 1
    %s17 = smul.addr %s16, 8
    %s18 = scalar_lea.vmem %s0, %s17
    %s19 = sadd.s32 0, 0
    %p20 = scmp.lt.s32.totalorder %s19, 0
    %s21 = scalar_select %p20, %s19, 0
    %s22 = smul.u32 4, %s21
    %s23 = ssub.s32 2, %s22
    %s24 = smul.u32 128, %s23
  $region5: #{l1_loss_pallas.1} parent=0 // pred_fallthru
    _
  // Predicated region
  $region6: #{l1_loss_pallas.1} parent=0 // pred_check
    _
  $region7: #{l1_loss_pallas.1} parent=0 // pred_check_branch
    %26 = sbr.rel (0) target = $region9
  $region8: #{l1_loss_pallas.1} parent=0 // pred_region
    %s27 = sadd.s32 0, 0
    %p28 = scmp.lt.s32.totalorder %s27, 0
    %s29 = scalar_select %p28, %s27, 0
    %s30 = smul.u32 4, %s29
    %s31 = ssub.s32 2, %s30
    %s32 = smul.u32 128, %s31
    %p33 = scmp.lt.s32.totalorder %s30, 1
    %s34 = scalar_select %p33, %s30, 1
    %s35 = smul.addr %s34, 8
    %s36 = scalar_lea.vmem %s1, %s35
    %s37 = sadd.s32 0, 0
    %p38 = scmp.lt.s32.totalorder %s37, 0
    %s39 = scalar_select %p38, %s37, 0
    %s40 = smul.u32 4, %s39
    %s41 = ssub.s32 2, %s40
    %s42 = smul.u32 128, %s41
  $region9: #{l1_loss_pallas.1} parent=0 // pred_fallthru
    _
  %s43 = sadd.s32 0, 0
  %p44 = scmp.lt.s32.totalorder %s43, 0
  %s45 = scalar_select %p44, %s43, 0
  %s46 = smul.u32 4, %s45
  %s47 = ssub.s32 2, %s46
  %s48 = smul.u32 128, %s47
  %p49 = scmp.lt.s32.totalorder %s46, 1
  %s50 = scalar_select %p49, %s46, 1
  %s51 = smul.addr %s50, 8
  %s52 = scalar_lea.vmem %s0, %s51
  %s53 = sadd.s32 0, 0
  %p54 = scmp.lt.s32.totalorder %s53, 0
  %s55 = scalar_select %p54, %s53, 0
  %s56 = smul.u32 4, %s55
  %s57 = ssub.s32 2, %s56
  %s58 = smul.u32 128, %s57
  %p59 = scmp.lt.s32.totalorder %s56, 1
  %s60 = scalar_select %p59, %s56, 1
  %s61 = smul.addr %s60, 8
  %s62 = scalar_lea.vmem %s1, %s61
  %s63 = sadd.s32 0, 0
  %p64 = scmp.lt.s32.totalorder %s63, 0
  %s65 = scalar_select %p64, %s63, 0
  %s66 = smul.u32 4, %s65
  %s67 = ssub.s32 2, %s66
  %s68 = smul.u32 128, %s67
  %p69 = scmp.lt.s32.totalorder %s66, 1
  %s70 = scalar_select %p69, %s66, 1
  %s71 = smul.addr %s70, 8
  %s72 = scalar_lea.vmem %s0, %s71
  %s73 = sadd.s32 0, 0
  %p74 = scmp.lt.s32.totalorder %s73, 0
  %s75 = scalar_select %p74, %s73, 0
  %s76 = smul.u32 4, %s75
  %s77 = ssub.s32 2, %s76
  %s78 = smul.u32 128, %s77
  %s79 = sadd.s32 0, 0
  %p80 = scmp.lt.s32.totalorder %s79, 0
  %s81 = scalar_select %p80, %s79, 0
  %s82 = smul.u32 4, %s81
  %s83 = ssub.s32 2, %s82
  %s84 = smul.u32 128, %s83
  %p85 = scmp.lt.s32.totalorder %s82, 1
  %s86 = scalar_select %p85, %s82, 1
  %s87 = smul.addr %s86, 8
  %s88 = scalar_lea.vmem %s1, %s87
  %s89 = sadd.s32 0, 0
  %p90 = scmp.lt.s32.totalorder %s89, 0
  %s91 = scalar_select %p90, %s89, 0
  %s92 = smul.u32 4, %s91
  %s93 = ssub.s32 2, %s92
  %s94 = smul.u32 128, %s93
  %p95 = scmp.eq.s32.totalorder 0, 0
  // Predicated region
  $region10: #{l1_loss_pallas.1} parent=0 // pred_check
    %p96 = pneg %p95
  $region11: #{l1_loss_pallas.1} parent=0 // pred_check_branch
    %98 = sbr.rel (%p96) target = $region13
  $region12: #{l1_loss_pallas.1} parent=0 // pred_region
    %99 = vst [vmem:[#allocation2] sm:$0xff] 0.0
    %100 = vst [vmem:[#allocation2 + $0x8] sm:$0xff] 0.0
    %101 = vst [vmem:[#allocation2 + $0x10] sm:$0xff] 0.0
    %102 = vst [vmem:[#allocation2 + $0x18] sm:$0xff] 0.0
  $region13: #{l1_loss_pallas.1} parent=0 // pred_fallthru
    _
  %s103 = sadd.s32 0, 0
  %s104 = smul.u32 %s103, 32
  %s105 = sadd.s32 %s104, 32
  %p106 = scmp.le.s32.totalorder %s105, 16
  // Predicated region
  $region14: #{l1_loss_pallas.1} parent=0 // pred_check
    %p107 = pneg %p106
  $region15: #{l1_loss_pallas.1} parent=0 // pred_check_branch
    %109 = sbr.rel (%p107) target = $region17
  $region16: #{l1_loss_pallas.1} parent=0 // pred_region
    %v110 = vld [vmem:[%s72] sm:$0xff]
    %v111 = vld [vmem:[%s72 + $0x8] sm:$0xff]
    %v112 = vld [vmem:[%s72 + $0x10] sm:$0xff]
    %v113 = vld [vmem:[%s72 + $0x18] sm:$0xff]
    %v114 = vld [vmem:[%s88] sm:$0xff]
    %v115 = vld [vmem:[%s88 + $0x8] sm:$0xff]
    %v116 = vld [vmem:[%s88 + $0x10] sm:$0xff]
    %v117 = vld [vmem:[%s88 + $0x18] sm:$0xff]
    %v118 = vsub.f32 %v110, %v114
    %v119 = vsub.f32 %v111, %v115
    %v120 = vsub.f32 %v112, %v116
    %v121 = vsub.f32 %v113, %v117
    %v122 = vand.u32 2147483647, %v118
    %v123 = vand.u32 2147483647, %v119
    %v124 = vand.u32 2147483647, %v120
    %v125 = vand.u32 2147483647, %v121
    %v126 = vld [vmem:[#allocation2] sm:$0xff]
    %v127 = vld [vmem:[#allocation2 + $0x8] sm:$0xff]
    %v128 = vld [vmem:[#allocation2 + $0x10] sm:$0xff]
    %v129 = vld [vmem:[#allocation2 + $0x18] sm:$0xff]
    %v130 = vadd.f32 %v122, 0.0
    %v131 = vadd.f32 %v123, 0.0
    %v132 = vadd.f32 %v124, 0.0
    %v133 = vadd.f32 %v125, 0.0
    %v134 = vadd.f32 %v126, %v130
    %v135 = vadd.f32 %v127, %v131
    %v136 = vadd.f32 %v128, %v132
    %v137 = vadd.f32 %v129, %v133
    %138 = vst [vmem:[#allocation2] sm:$0xff] %v134
    %139 = vst [vmem:[#allocation2 + $0x8] sm:$0xff] %v135
    %140 = vst [vmem:[#allocation2 + $0x10] sm:$0xff] %v136
    %141 = vst [vmem:[#allocation2 + $0x18] sm:$0xff] %v137
  $region17: #{l1_loss_pallas.1} parent=0 // pred_fallthru
    _
  %p142 = scmp.gt.s32.totalorder %s105, 16
  // Predicated region
  $region18: #{l1_loss_pallas.1} parent=0 // pred_check
    %p143 = pneg %p142
  $region19: #{l1_loss_pallas.1} parent=0 // pred_check_branch
    %145 = sbr.rel (%p143) target = $region21
  $region20: #{l1_loss_pallas.1} parent=0 // pred_region
    %v146 = vld [vmem:[%s72] sm:$0xff]
    %v147 = vld [vmem:[%s72 + $0x8] sm:$0xff]
    %v148 = vld [vmem:[%s72 + $0x10] sm:$0xff]
    %v149 = vld [vmem:[%s72 + $0x18] sm:$0xff]
    %v150 = vld [vmem:[%s88] sm:$0xff]
    %v151 = vld [vmem:[%s88 + $0x8] sm:$0xff]
    %v152 = vld [vmem:[%s88 + $0x10] sm:$0xff]
    %v153 = vld [vmem:[%s88 + $0x18] sm:$0xff]
    %v154 = vlaneseq
    %v155 = vshrl.u32 %v154, 7
    %v156 = vadd.s32 %v155, 8
    %v157 = vadd.s32 %v155, 16
    %v158 = vadd.s32 %v155, 24
    %v159 = vstv %s104
    %v160 = vadd.s32 %v159, %v155
    %v161 = vadd.s32 %v159, %v156
    %v162 = vadd.s32 %v159, %v157
    %v163 = vadd.s32 %v159, %v158
    %vm164 = vcmp.lt.s32.totalorder %v160, 16
    %vm165 = vcmp.lt.s32.totalorder %v161, 16
    %vm166 = vcmp.lt.s32.totalorder %v162, 16
    %vm167 = vcmp.lt.s32.totalorder %v163, 16
    %v168 = vsub.f32 %v146, %v150
    %v169 = vsub.f32 %v147, %v151
    %v170 = vsub.f32 %v148, %v152
    %v171 = vsub.f32 %v149, %v153
    %v172 = vand.u32 2147483647, %v168
    %v173 = vand.u32 2147483647, %v169
    %v174 = vand.u32 2147483647, %v170
    %v175 = vand.u32 2147483647, %v171
    %v176 = vsel %vm164, %v172, 0.0
    %v177 = vsel %vm165, %v173, 0.0
    %v178 = vsel %vm166, %v174, 0.0
    %v179 = vsel %vm167, %v175, 0.0
    %v180 = vld [vmem:[#allocation2] sm:$0xff]
    %v181 = vld [vmem:[#allocation2 + $0x8] sm:$0xff]
    %v182 = vld [vmem:[#allocation2 + $0x10] sm:$0xff]
    %v183 = vld [vmem:[#allocation2 + $0x18] sm:$0xff]
    %v184 = vadd.f32 %v176, 0.0
    %v185 = vadd.f32 %v177, 0.0
    %v186 = vadd.f32 %v178, 0.0
    %v187 = vadd.f32 %v179, 0.0
    %v188 = vadd.f32 %v180, %v184
    %v189 = vadd.f32 %v181, %v185
    %v190 = vadd.f32 %v182, %v186
    %v191 = vadd.f32 %v183, %v187
    %192 = vst [vmem:[#allocation2] sm:$0xff] %v188
    %193 = vst [vmem:[#allocation2 + $0x8] sm:$0xff] %v189
    %194 = vst [vmem:[#allocation2 + $0x10] sm:$0xff] %v190
    %195 = vst [vmem:[#allocation2 + $0x18] sm:$0xff] %v191
  $region21: #{l1_loss_pallas.1} parent=0 // pred_fallthru
    _
  // Predicated region
  $region22: #{l1_loss_pallas.1} parent=0 // pred_check
    %p196 = pneg %p95
  $region23: #{l1_loss_pallas.1} parent=0 // pred_check_branch
    %198 = sbr.rel (%p196) target = $region25
  $region24: #{l1_loss_pallas.1} parent=0 // pred_region
    %v199 = vld [vmem:[#allocation2] sm:$0xff]
    %v200 = vld [vmem:[#allocation2 + $0x8] sm:$0xff]
    %v201 = vld [vmem:[#allocation2 + $0x10] sm:$0xff]
    %v202 = vld [vmem:[#allocation2 + $0x18] sm:$0xff]
    %203 = vst [vmem:[%s2] sm:$0xff] %v199
    %204 = vst [vmem:[%s2 + $0x8] sm:$0xff] %v200
    %205 = vst [vmem:[%s2 + $0x10] sm:$0xff] %v201
    %206 = vst [vmem:[%s2 + $0x18] sm:$0xff] %v202
  $region25: #{l1_loss_pallas.1} parent=0 // pred_fallthru
    _
  // Predicated region
  $region26: #{l1_loss_pallas.1} parent=0 // pred_check
    _
  $region27: #{l1_loss_pallas.1} parent=0 // pred_check_branch
    %208 = sbr.rel (0) target = $region29
  $region28: #{l1_loss_pallas.1} parent=0 // pred_region
    _
  $region29: #{l1_loss_pallas.1} parent=0 // pred_fallthru
    _
  // Predicated region
  $region30: #{l1_loss_pallas.1} parent=0 // pred_check
    _
  $region31: #{l1_loss_pallas.1} parent=0 // pred_check_branch
    %210 = sbr.rel (0) target = $region33
  $region32: #{l1_loss_pallas.1} parent=0 // pred_region
    _
  $region33: #{l1_loss_pallas.1} parent=0 // pred_fallthru
    _

</llo_original>
